<compile_context>
chip_gen: v6e
topology: v6e:2x2x1
jax: 0.10.0
libtpu: 0.0.40
codegen_flags: <defaults>
</compile_context>

<pallas_src>
import math

import jax
import jax.numpy as jnp
from jax import lax
from jax.experimental import pallas as pl
from jax.experimental.pallas import tpu as pltpu


def _gelu_exact(x):
    # PyTorch nn.GELU() default: exact erf formulation.
    return 0.5 * x * (1.0 + lax.erf(x / jnp.sqrt(2.0).astype(x.dtype)))


def gmlp_kernel(x_ref, w1_ref, b1_ref, w2_ref, b2_ref, o_ref):
    # Channels-on-sublane layout: x is (Cin, tile_n), output is (Cout, tile_n).
    x = x_ref[...]                                                   # (Cin, tn)
    h = jnp.dot(w1_ref[...], x,
                preferred_element_type=jnp.float32) + b1_ref[...]    # (2*hidden, tn)
    hidden = w2_ref.shape[1]
    a = h[:hidden, :]     # chunk(2, dim=channels) == free sublane row slices
    z = h[hidden:, :]
    g = a * _gelu_exact(z)                                           # (hidden, tn)
    y = jnp.dot(w2_ref[...], g,
                preferred_element_type=jnp.float32) + b2_ref[...]    # (Cout, tn)
    o_ref[...] = y.astype(o_ref.dtype)                               # lane-dense store


def gmlp_forward(x_nchw, params, *, tile_n=2048):
    """x_nchw: (B, Cin, H, W) float32. Returns (B, Cout, H, W)."""
    w1, b1, w2, b2 = params["w1"], params["b1"], params["w2"], params["b2"]
    cin = w1.shape[1]
    two_hidden = w1.shape[0]
    hidden = w2.shape[1]
    cout = w2.shape[0]

    B, C, H, W = x_nchw.shape
    assert C == cin
    HW = H * W

    # Pixel tile: lane axis must be a multiple of 128 (or the full dim).
    tile_n = min(tile_n, HW)
    assert HW % tile_n == 0, "pad spatial dims so H*W is a multiple of tile_n"
    assert tile_n % 128 == 0 or tile_n == HW

    # NCHW viewed as (B, C, H*W): contiguous -> these reshapes are free.
    x3d = x_nchw.reshape(B, cin, HW)
    b1c = b1.reshape(two_hidden, 1)   # broadcast over the pixel (lane) axis
    b2c = b2.reshape(cout, 1)

    grid = (B, HW // tile_n)
    # Weights/biases: constant index_map -> stay resident in VMEM across steps.
    resident = lambda *shape: pl.BlockSpec(shape, lambda b, t: tuple(0 for _ in shape))

    out3d = pl.pallas_call(
        gmlp_kernel,
        out_shape=jax.ShapeDtypeStruct((B, cout, HW), x_nchw.dtype),
        grid_spec=pltpu.PrefetchScalarGridSpec(
            num_scalar_prefetch=0,
            grid=grid,
            in_specs=[
                # activations: batch dim squeezed, kernel sees (Cin, tile_n)
                pl.BlockSpec((None, cin, tile_n), lambda b, t: (b, 0, t)),
                resident(two_hidden, cin),    # W1 (fused a/z halves)
                resident(two_hidden, 1),      # b1
                resident(cout, hidden),       # W2
                resident(cout, 1),            # b2
            ],
            out_specs=pl.BlockSpec((None, cout, tile_n), lambda b, t: (b, 0, t)),
        ),
        compiler_params=pltpu.CompilerParams(
            dimension_semantics=("parallel", "parallel")),
    )(x3d, w1, b1c, w2, b2c)

    return out3d.reshape(B, cout, H, W)


def init_params(key, in_features, hidden_features, out_features):
    """Deterministic init matching nn.Linear shapes:
       fc1.weight (2*hidden, in), fc1.bias (2*hidden,)
       fc2.weight (out, hidden),  fc2.bias (out,)"""
    k1, k2, k3, k4 = jax.random.split(key, 4)
    bound1 = 1.0 / math.sqrt(in_features)
    bound2 = 1.0 / math.sqrt(hidden_features)
    w1 = jax.random.uniform(k1, (2 * hidden_features, in_features),
                            jnp.float32, -bound1, bound1)
    b1 = jax.random.uniform(k2, (2 * hidden_features,), jnp.float32, -bound1, bound1)
    w2 = jax.random.uniform(k3, (out_features, hidden_features),
                            jnp.float32, -bound2, bound2)
    b2 = jax.random.uniform(k4, (out_features,), jnp.float32, -bound2, bound2)
    return {"w1": w1, "b1": b1, "w2": w2, "b2": b2}


def gmlp_reference(x_nchw, params):
    """Pure-JAX reference of the PyTorch forward (channels_first=True)."""
    w1, b1, w2, b2 = params["w1"], params["b1"], params["w2"], params["b2"]
    hidden = w2.shape[1]
    x = jnp.transpose(x_nchw, (0, 2, 3, 1))                     # NHWC
    h = jnp.einsum("bhwc,oc->bhwo", x, w1) + b1                 # 1x1 conv
    a, z = h[..., :hidden], h[..., hidden:]
    g = a * (0.5 * z * (1.0 + lax.erf(z / jnp.sqrt(2.0))))
    y = jnp.einsum("bhwc,oc->bhwo", g, w2) + b2
    return jnp.transpose(y, (0, 3, 1, 2))                       # back to NCHW


if __name__ == "__main__":
    key = jax.random.PRNGKey(0)
    kx, kp = jax.random.split(key)

    B, Cin, Hsp, Wsp = 2, 4, 16, 16
    hidden, Cout = 32, 4          # out_features defaults to in_features

    x = jax.random.normal(kx, (B, Cin, Hsp, Wsp), jnp.float32)
    params = init_params(kp, Cin, hidden, Cout)

    out = gmlp_forward(x, params)
    out = jax.block_until_ready(out)

    ref = gmlp_reference(x, params)
    assert out.shape == (B, Cout, Hsp, Wsp)
    assert jnp.allclose(out, ref, atol=1e-5, rtol=1e-5), "mismatch vs reference"

    print("KERNEL_OK")
</pallas_src>

<mosaic_0001>
module attributes {stable_mosaic.version = 11 : i64} {
  func.func @gmlp_kernel(%arg0: i32, %arg1: i32, %arg2: memref<1x4x256xf32, #tpu.memory_space<vmem>>, %arg3: memref<64x4xf32, #tpu.memory_space<vmem>>, %arg4: memref<64x1xf32, #tpu.memory_space<vmem>>, %arg5: memref<4x32xf32, #tpu.memory_space<vmem>>, %arg6: memref<4x1xf32, #tpu.memory_space<vmem>>, %arg7: memref<1x4x256xf32, #tpu.memory_space<vmem>>) attributes {dimension_semantics = [#tpu.dimension_semantics<parallel>, #tpu.dimension_semantics<parallel>], iteration_bounds = array<i64: 2, 1>, scalar_prefetch = 0 : i64, scratch_operands = 0 : i64, tpu.core_type = #tpu.core_type<tc>, window_params = [{transform_indices = @transform_0, window_bounds = array<i64: 1, 4, 256>}, {pipeline_mode = #tpu.pipeline_mode<synchronous>, transform_indices = @transform_1, window_bounds = array<i64: 64, 4>}, {pipeline_mode = #tpu.pipeline_mode<synchronous>, transform_indices = @transform_2, window_bounds = array<i64: 64, 1>}, {pipeline_mode = #tpu.pipeline_mode<synchronous>, transform_indices = @transform_3, window_bounds = array<i64: 4, 32>}, {pipeline_mode = #tpu.pipeline_mode<synchronous>, transform_indices = @transform_4, window_bounds = array<i64: 4, 1>}, {transform_indices = @transform_5, window_bounds = array<i64: 1, 4, 256>}]} {
    %c0 = arith.constant 0 : index
    %c0_0 = arith.constant 0 : index
    %c0_1 = arith.constant 0 : index
    %0 = vector.load %arg2[%c0, %c0_0, %c0_1] : memref<1x4x256xf32, #tpu.memory_space<vmem>>, vector<1x4x256xf32>
    %1 = vector.shape_cast %0 : vector<1x4x256xf32> to vector<4x256xf32>
    %c0_2 = arith.constant 0 : index
    %c0_3 = arith.constant 0 : index
    %2 = vector.load %arg3[%c0_2, %c0_3] : memref<64x4xf32, #tpu.memory_space<vmem>>, vector<64x4xf32>
    %cst = arith.constant dense<0.000000e+00> : vector<64x256xf32>
    %3 = tpu.matmul %2, %1, %cst {dimension_numbers = #tpu.dot_dimension_numbers<[1], [0], [0], [1], [0, 0, 1, 1], [], []>} : vector<64x4xf32>, vector<4x256xf32>, vector<64x256xf32> -> vector<64x256xf32>
    %c0_4 = arith.constant 0 : index
    %c0_5 = arith.constant 0 : index
    %4 = vector.load %arg4[%c0_4, %c0_5] : memref<64x1xf32, #tpu.memory_space<vmem>>, vector<64x1xf32>
    %5 = vector.broadcast %4 : vector<64x1xf32> to vector<64x256xf32>
    %6 = arith.addf %3, %5 : vector<64x256xf32>
    %7 = vector.extract_strided_slice %6 {offsets = [0, 0], sizes = [32, 256], strides = [1, 1]} : vector<64x256xf32> to vector<32x256xf32>
    %8 = vector.extract_strided_slice %6 {offsets = [32, 0], sizes = [32, 256], strides = [1, 1]} : vector<64x256xf32> to vector<32x256xf32>
    %cst_6 = arith.constant 5.000000e-01 : f32
    %9 = vector.broadcast %cst_6 : f32 to vector<32x256xf32>
    %10 = arith.mulf %9, %8 : vector<32x256xf32>
    %cst_7 = arith.constant 2.000000e+00 : f32
    %11 = math.sqrt %cst_7 : f32
    %12 = vector.broadcast %11 : f32 to vector<32x256xf32>
    %13 = arith.divf %8, %12 : vector<32x256xf32>
    %14 = math.erf %13 : vector<32x256xf32>
    %cst_8 = arith.constant 1.000000e+00 : f32
    %15 = vector.broadcast %cst_8 : f32 to vector<32x256xf32>
    %16 = arith.addf %15, %14 : vector<32x256xf32>
    %17 = arith.mulf %10, %16 : vector<32x256xf32>
    %18 = arith.mulf %7, %17 : vector<32x256xf32>
    %c0_9 = arith.constant 0 : index
    %c0_10 = arith.constant 0 : index
    %19 = vector.load %arg5[%c0_9, %c0_10] : memref<4x32xf32, #tpu.memory_space<vmem>>, vector<4x32xf32>
    %cst_11 = arith.constant dense<0.000000e+00> : vector<4x256xf32>
    %20 = tpu.matmul %19, %18, %cst_11 {dimension_numbers = #tpu.dot_dimension_numbers<[1], [0], [0], [1], [0, 0, 1, 1], [], []>} : vector<4x32xf32>, vector<32x256xf32>, vector<4x256xf32> -> vector<4x256xf32>
    %c0_12 = arith.constant 0 : index
    %c0_13 = arith.constant 0 : index
    %21 = vector.load %arg6[%c0_12, %c0_13] : memref<4x1xf32, #tpu.memory_space<vmem>>, vector<4x1xf32>
    %22 = vector.broadcast %21 : vector<4x1xf32> to vector<4x256xf32>
    %23 = arith.addf %20, %22 : vector<4x256xf32>
    %c0_14 = arith.constant 0 : index
    %c0_15 = arith.constant 0 : index
    %c0_16 = arith.constant 0 : index
    %24 = vector.load %arg7[%c0_14, %c0_15, %c0_16] : memref<1x4x256xf32, #tpu.memory_space<vmem>>, vector<1x4x256xf32>
    %25 = vector.shape_cast %24 : vector<1x4x256xf32> to vector<4x256xf32>
    %26 = vector.shape_cast %23 : vector<4x256xf32> to vector<1x4x256xf32>
    tpu.vector_store %arg7[%c0_14, %c0_15, %c0_16], %26 {strides = array<i32>} : memref<1x4x256xf32, #tpu.memory_space<vmem>>, vector<1x4x256xf32>,
    return
  }
  func.func @transform_0(%arg0: i32, %arg1: i32) -> (i32, i32, i32) {
    %c0_i32 = arith.constant 0 : i32
    %c0_i32_0 = arith.constant 0 : i32
    return %arg0, %c0_i32, %arg1 : i32, i32, i32
  }
  func.func @transform_1(%arg0: i32, %arg1: i32) -> (i32, i32) {
    %c0_i32 = arith.constant 0 : i32
    %c0_i32_0 = arith.constant 0 : i32
    %c0_i32_1 = arith.constant 0 : i32
    return %c0_i32, %c0_i32_0 : i32, i32
  }
  func.func @transform_2(%arg0: i32, %arg1: i32) -> (i32, i32) {
    %c0_i32 = arith.constant 0 : i32
    %c0_i32_0 = arith.constant 0 : i32
    %c0_i32_1 = arith.constant 0 : i32
    return %c0_i32, %c0_i32_0 : i32, i32
  }
  func.func @transform_3(%arg0: i32, %arg1: i32) -> (i32, i32) {
    %c0_i32 = arith.constant 0 : i32
    %c0_i32_0 = arith.constant 0 : i32
    %c0_i32_1 = arith.constant 0 : i32
    return %c0_i32, %c0_i32_0 : i32, i32
  }
  func.func @transform_4(%arg0: i32, %arg1: i32) -> (i32, i32) {
    %c0_i32 = arith.constant 0 : i32
    %c0_i32_0 = arith.constant 0 : i32
    %c0_i32_1 = arith.constant 0 : i32
    return %c0_i32, %c0_i32_0 : i32, i32
  }
  func.func @transform_5(%arg0: i32, %arg1: i32) -> (i32, i32, i32) {
    %c0_i32 = arith.constant 0 : i32
    %c0_i32_0 = arith.constant 0 : i32
    return %arg0, %c0_i32, %arg1 : i32, i32, i32
  }
}

</mosaic_0001>

<llo_original>
// kernel: tpu_custom_call.1
$region0: #{tpu_custom_call.1}
  #allocation0 [shape = 'u32[]', space=smem, size = 0x4, offset = 0x4, fixed_abs, tag = 'smem constant byte address 0x4 - core index']
  #allocation1 [shape = 'u32[144,128]{1,0:T(1,128)}', space=vmem, size = 0x12000, scoped, tag = 'internal scratch']
  %s0 = inlined_call_operand.vmem [shape: f32[2,4,256], index: 0, kind: input, shape index: {}]
  %s1 = inlined_call_operand.vmem [shape: f32[64,4], index: 1, kind: input, shape index: {}]
  %s2 = inlined_call_operand.vmem [shape: f32[64,1], index: 2, kind: input, shape index: {}]
  %s3 = inlined_call_operand.vmem [shape: f32[4,32], index: 3, kind: input, shape index: {}]
  %s4 = inlined_call_operand.vmem [shape: f32[4,1], index: 4, kind: input, shape index: {}]
  %s5 = inlined_call_operand.hbm [shape: f32[2,4,256], index: 5, kind: output, shape index: {}]
  %s6 = sld [smem:[#allocation0]]
  $region53: #{tpu_custom_call.1} parent=0
    _
  %s8 = ssub.s32 1, %s6
  %s9 = scalar_select 0, %s8, %s6
  $region1: #{tpu_custom_call.1} parent=0
    #allocation2 [shape = 'u8[8192]{0}', space=vmem, size = 0x2000, scoped, tag = 'output window, operand 0']
    #allocation3 [shape = 's32[2]{0}', space=sflag, size = 0x8, scoped, tag = 'scoped memory for tpu_custom_call.1']
    %10 = vsyncpa [#allocation3], 0
    %s11 = scalar_lea.sflag [#allocation3], 1
    %12 = vsyncpa %s11, 0
    loop: start=0, step=1, limit=4
    $region2: #{tpu_custom_call.1} parent=1 // loop_pre_header
      _
    $region3: #{tpu_custom_call.1} parent=1 // loop_header
      %s14 = sphi 0, %s18
      %p15 = scmp.ge.s32.totalorder %s14, 4
      %s21 = sphi 0, %s33
      %s22 = sphi 0, %s29
      %s23 = sphi 0, %s21
      %s24 = sphi 0, %s22
      %s25 = sphi 0, %s23
      %s26 = sphi 0, %s24
      %s38 = sphi 0, %s40
      %s41 = sphi 0, %s38
      %s42 = sphi 0, %s41
      %s58 = sphi 0, %s42
      %s62 = sphi 0, %s62
      %s64 = sphi 0, %s62
      %s65 = sphi 0, %s64
      %s79 = sphi 0, %s65
      %s83 = sphi 0, %s83
      %s85 = sphi 0, %s83
      %s86 = sphi 0, %s85
      %s100 = sphi 0, %s86
      %s104 = sphi 0, %s104
      %s106 = sphi 0, %s104
      %s107 = sphi 0, %s106
      %s121 = sphi 0, %s107
      %s125 = sphi 0, %s125
      %s127 = sphi 0, %s125
      %s128 = sphi 0, %s127
      %s142 = sphi 0, %s128
      %s150 = sphi 0, %s152
      %s153 = sphi 0, %s150
      %s154 = sphi 0, %s153
      %s170 = sphi 0, %s154
    $region4: #{tpu_custom_call.1} parent=1 // loop_header_branch
      %17 = sbr.rel (%p15) target = $region8
    $region5: #{tpu_custom_call.1} parent=1 // loop_body
      %s19 = ssub.s32 %s14, 1
      %s20 = ssub.s32 %s14, 2
      %s27 = sadd.s32 1, %s22
      %p28 = scmp.ge.s32.totalorder %s27, 1
      %s29 = scalar_select %p28, 0, %s27
      %s30 = sadd.s32 1, %s21
      %s31 = scalar_select %p28, %s30, %s21
      %p32 = scmp.ge.s32.totalorder %s31, 2
      %s33 = scalar_select %p32, 0, %s31
      %s34 = ssub.s32 %s21, %s33
      %s35 = ssub.s32 %s22, %s29
      %s36 = sor.u32 %s34, %s35
      %p37 = scmp.eq.s32.totalorder %s36, 0
      %s39 = sadd.s32 %s38, 1
      %s40 = scalar_select %p37, %s38, %s39
      %p43 = pneg %p37
      %p44 = scmp.eq.s32.totalorder %s14, 1
      %p45 = por %p43, %p44
      %p46 = scmp.ne.s32.totalorder %s38, %s41
      %p47 = scmp.eq.s32.totalorder %s14, 0
      %p48 = por %p46, %p47
      %p49 = scmp.ne.s32.totalorder %s38, %s41
      %p50 = scmp.eq.s32.totalorder %s19, 1
      %p51 = por %p49, %p50
      %p52 = scmp.ne.s32.totalorder %s41, %s42
      %p53 = scmp.eq.s32.totalorder %s19, 0
      %p54 = por %p52, %p53
      %p55 = scmp.ne.s32.totalorder %s41, %s42
      %p56 = scmp.eq.s32.totalorder %s20, 1
      %p57 = por %p55, %p56
      %p59 = scmp.ne.s32.totalorder %s42, %s58
      %p60 = scmp.eq.s32.totalorder %s20, 0
      %p61 = por %p59, %p60
      %s63 = sadd.s32 %s62, 1
      %p66 = scmp.eq.s32.totalorder %s14, 1
      %p67 = scmp.ne.s32.totalorder %s62, %s64
      %p68 = scmp.eq.s32.totalorder %s14, 0
      %p69 = por %p67, %p68
      %p70 = scmp.ne.s32.totalorder %s62, %s64
      %p71 = scmp.eq.s32.totalorder %s19, 1
      %p72 = por %p70, %p71
      %p73 = scmp.ne.s32.totalorder %s64, %s65
      %p74 = scmp.eq.s32.totalorder %s19, 0
      %p75 = por %p73, %p74
      %p76 = scmp.ne.s32.totalorder %s64, %s65
      %p77 = scmp.eq.s32.totalorder %s20, 1
      %p78 = por %p76, %p77
      %p80 = scmp.ne.s32.totalorder %s65, %s79
      %p81 = scmp.eq.s32.totalorder %s20, 0
      %p82 = por %p80, %p81
      %s84 = sadd.s32 %s83, 1
      %p87 = scmp.eq.s32.totalorder %s14, 1
      %p88 = scmp.ne.s32.totalorder %s83, %s85
      %p89 = scmp.eq.s32.totalorder %s14, 0
      %p90 = por %p88, %p89
      %p91 = scmp.ne.s32.totalorder %s83, %s85
      %p92 = scmp.eq.s32.totalorder %s19, 1
      %p93 = por %p91, %p92
      %p94 = scmp.ne.s32.totalorder %s85, %s86
      %p95 = scmp.eq.s32.totalorder %s19, 0
      %p96 = por %p94, %p95
      %p97 = scmp.ne.s32.totalorder %s85, %s86
      %p98 = scmp.eq.s32.totalorder %s20, 1
      %p99 = por %p97, %p98
      %p101 = scmp.ne.s32.totalorder %s86, %s100
      %p102 = scmp.eq.s32.totalorder %s20, 0
      %p103 = por %p101, %p102
      %s105 = sadd.s32 %s104, 1
      %p108 = scmp.eq.s32.totalorder %s14, 1
      %p109 = scmp.ne.s32.totalorder %s104, %s106
      %p110 = scmp.eq.s32.totalorder %s14, 0
      %p111 = por %p109, %p110
      %p112 = scmp.ne.s32.totalorder %s104, %s106
      %p113 = scmp.eq.s32.totalorder %s19, 1
      %p114 = por %p112, %p113
      %p115 = scmp.ne.s32.totalorder %s106, %s107
      %p116 = scmp.eq.s32.totalorder %s19, 0
      %p117 = por %p115, %p116
      %p118 = scmp.ne.s32.totalorder %s106, %s107
      %p119 = scmp.eq.s32.totalorder %s20, 1
      %p120 = por %p118, %p119
      %p122 = scmp.ne.s32.totalorder %s107, %s121
      %p123 = scmp.eq.s32.totalorder %s20, 0
      %p124 = por %p122, %p123
      %s126 = sadd.s32 %s125, 1
      %p129 = scmp.eq.s32.totalorder %s14, 1
      %p130 = scmp.ne.s32.totalorder %s125, %s127
      %p131 = scmp.eq.s32.totalorder %s14, 0
      %p132 = por %p130, %p131
      %p133 = scmp.ne.s32.totalorder %s125, %s127
      %p134 = scmp.eq.s32.totalorder %s19, 1
      %p135 = por %p133, %p134
      %p136 = scmp.ne.s32.totalorder %s127, %s128
      %p137 = scmp.eq.s32.totalorder %s19, 0
      %p138 = por %p136, %p137
      %p139 = scmp.ne.s32.totalorder %s127, %s128
      %p140 = scmp.eq.s32.totalorder %s20, 1
      %p141 = por %p139, %p140
      %p143 = scmp.ne.s32.totalorder %s128, %s142
      %p144 = scmp.eq.s32.totalorder %s20, 0
      %p145 = por %p143, %p144
      %s146 = ssub.s32 %s21, %s33
      %s147 = ssub.s32 %s22, %s29
      %s148 = sor.u32 %s146, %s147
      %p149 = scmp.eq.s32.totalorder %s148, 0
      %s151 = sadd.s32 %s150, 1
      %s152 = scalar_select %p149, %s150, %s151
      %p155 = pneg %p149
      %p156 = scmp.eq.s32.totalorder %s14, 1
      %p157 = por %p155, %p156
      %p158 = scmp.ne.s32.totalorder %s150, %s153
      %p159 = scmp.eq.s32.totalorder %s14, 0
      %p160 = por %p158, %p159
      %p161 = scmp.ne.s32.totalorder %s150, %s153
      %p162 = scmp.eq.s32.totalorder %s19, 1
      %p163 = por %p161, %p162
      %p164 = scmp.ne.s32.totalorder %s153, %s154
      %p165 = scmp.eq.s32.totalorder %s19, 0
      %p166 = por %p164, %p165
      %p167 = scmp.ne.s32.totalorder %s153, %s154
      %p168 = scmp.eq.s32.totalorder %s20, 1
      %p169 = por %p167, %p168
      %p171 = scmp.ne.s32.totalorder %s154, %s170
      %p172 = scmp.eq.s32.totalorder %s20, 0
      %p173 = por %p171, %p172
      %p174 = scmp.le.s32.totalorder 1, %s14
      %p175 = scmp.lt.s32.totalorder %s14, 3
      %p176 = pnand %p174, %p175
      %p177 = pneg %p176
      // Predicated region
      $region9: #{tpu_custom_call.1} parent=5 // pred_check
        _
      $region10: #{tpu_custom_call.1} parent=5 // pred_check_branch
        %179 = sbr.rel (%p176) target = $region12
      $region11: #{tpu_custom_call.1} parent=5 // pred_region
        %s180 = ssub.s32 %s14, 1
        // Predicated region
        $region13: #{tpu_custom_call.1} parent=11 // pred_check
          %p181 = pneg %p75
        $region14: #{tpu_custom_call.1} parent=11 // pred_check_branch
          %183 = sbr.rel (%p181) target = $region16
        $region15: #{tpu_custom_call.1} parent=11 // pred_region
          _
        $region16: #{tpu_custom_call.1} parent=11 // pred_fallthru
          _
        // Predicated region
        $region17: #{tpu_custom_call.1} parent=11 // pred_check
          %p184 = pneg %p96
        $region18: #{tpu_custom_call.1} parent=11 // pred_check_branch
          %186 = sbr.rel (%p184) target = $region20
        $region19: #{tpu_custom_call.1} parent=11 // pred_region
          _
        $region20: #{tpu_custom_call.1} parent=11 // pred_fallthru
          _
        // Predicated region
        $region21: #{tpu_custom_call.1} parent=11 // pred_check
          %p187 = pneg %p117
        $region22: #{tpu_custom_call.1} parent=11 // pred_check_branch
          %189 = sbr.rel (%p187) target = $region24
        $region23: #{tpu_custom_call.1} parent=11 // pred_region
          _
        $region24: #{tpu_custom_call.1} parent=11 // pred_fallthru
          _
        // Predicated region
        $region25: #{tpu_custom_call.1} parent=11 // pred_check
          %p190 = pneg %p138
        $region26: #{tpu_custom_call.1} parent=11 // pred_check_branch
          %192 = sbr.rel (%p190) target = $region28
        $region27: #{tpu_custom_call.1} parent=11 // pred_region
          _
        $region28: #{tpu_custom_call.1} parent=11 // pred_fallthru
          _
      $region12: #{tpu_custom_call.1} parent=5 // pred_fallthru
        _
      %p193 = scmp.lt.s32.totalorder %s14, 2
      // Predicated region
      $region29: #{tpu_custom_call.1} parent=5 // pred_check
        %p194 = pneg %p193
      $region30: #{tpu_custom_call.1} parent=5 // pred_check_branch
        %196 = sbr.rel (%p194) target = $region32
      $region31: #{tpu_custom_call.1} parent=5 // pred_region
        // Predicated region
        $region33: #{tpu_custom_call.1} parent=31 // pred_check
          %p197 = pneg %p48
        $region34: #{tpu_custom_call.1} parent=31 // pred_check_branch
          %199 = sbr.rel (%p197) target = $region36
        $region35: #{tpu_custom_call.1} parent=31 // pred_region
          %s200 = smul.u32 2, %s22
          %p201 = scmp.lt.s32.totalorder %s21, 1
          %s202 = scalar_select %p201, %s21, 1
          %p203 = scmp.lt.s32.totalorder %s200, 1
          %s204 = scalar_select %p203, %s200, 1
          %s205 = smul.addr %s202, 2
          %s206 = sadd.s32 %s204, %s205
          %s207 = smul.addr %s206, 4
          %s208 = scalar_lea.vmem %s0, %s207
          %s209 = smul.u32 2, %s22
        $region36: #{tpu_custom_call.1} parent=31 // pred_fallthru
          _
      $region32: #{tpu_custom_call.1} parent=5 // pred_fallthru
        _
      %p210 = scmp.le.s32.totalorder 1, %s14
      %p211 = scmp.lt.s32.totalorder %s14, 3
      %p212 = pnand %p210, %p211
      %p213 = pneg %p212
      // Predicated region
      $region37: #{tpu_custom_call.1} parent=5 // pred_check
        _
      $region38: #{tpu_custom_call.1} parent=5 // pred_check_branch
        %215 = sbr.rel (%p212) target = $region40
      $region39: #{tpu_custom_call.1} parent=5 // pred_region
        %s216 = ssub.s32 %s14, 1
        %s217 = smul.u32 2, %s24
        %p218 = scmp.lt.s32.totalorder %s23, 1
        %s219 = scalar_select %p218, %s23, 1
        %p220 = scmp.lt.s32.totalorder %s217, 1
        %s221 = scalar_select %p220, %s217, 1
        %s222 = smul.addr %s219, 2
        %s223 = sadd.s32 %s221, %s222
        %s224 = smul.addr %s223, 4
        %s225 = scalar_lea.vmem %s0, %s224
        %p226 = pneg %p54
        %p227 = pneg %p51
        %p228 = pneg %p75
        %p229 = pneg %p72
        %p230 = pneg %p96
        %p231 = pneg %p93
        %p232 = pneg %p117
        %p233 = pneg %p114
        %p234 = pneg %p138
        %p235 = pneg %p135
        %p236 = pneg %p166
        %p237 = pneg %p163
        %s238 = sand.u32 %s153, 1
        %s239 = scalar_lea.sflag [#allocation3], %s238
        %s240 = sand.u32 %s153, 1
        %s241 = smul.addr %s240, 8
        %s242 = scalar_lea.vmem [#allocation2], %s241
        %s243 = smul.u32 2, %s24
        %p244 = scmp.lt.s32.totalorder %s23, 1
        %s245 = scalar_select %p244, %s23, 1
        %p246 = scmp.lt.s32.totalorder %s243, 1
        %s247 = scalar_select %p246, %s243, 1
        %s248 = smul.addr %s245, 2
        %s249 = sadd.s32 %s247, %s248
        %s250 = smul.addr %s249, 4
        %s251 = scalar_lea.vmem %s0, %s250
        %s252 = smul.u32 2, %s24
        %s253 = smul.u32 2, %s24
        %v254 = vld [vmem:[%s251] sm:$0xff]
        %v255 = vld [vmem:[%s1] sm:$0xff]
        %v256 = vld [vmem:[%s1 + $0x8] sm:$0xff]
        %v257 = vld [vmem:[%s1 + $0x10] sm:$0xff]
        %v258 = vld [vmem:[%s1 + $0x18] sm:$0xff]
        %v259 = vld [vmem:[%s1 + $0x20] sm:$0xff]
        %v260 = vld [vmem:[%s1 + $0x28] sm:$0xff]
        %v261 = vld [vmem:[%s1 + $0x30] sm:$0xff]
        %v262 = vld [vmem:[%s1 + $0x38] sm:$0xff]
        %v263 = vld [vmem:[%s2] sm:$0xff]
        %v264 = vld [vmem:[%s2 + $0x8] sm:$0xff]
        %v265 = vld [vmem:[%s2 + $0x10] sm:$0xff]
        %v266 = vld [vmem:[%s2 + $0x18] sm:$0xff]
        %v267 = vld [vmem:[%s2 + $0x20] sm:$0xff]
        %v268 = vld [vmem:[%s2 + $0x28] sm:$0xff]
        %v269 = vld [vmem:[%s2 + $0x30] sm:$0xff]
        %v270 = vld [vmem:[%s2 + $0x38] sm:$0xff]
        %272 = vset.pattern.permute.xlu0 0
        %273 = vperm.xlu0 %272, %v263
        %v274 = vpop.permute.xlu0 %273
        %277 = vset.pattern.permute.xlu0 0
        %278 = vperm.xlu0 %277, %v264
        %v279 = vpop.permute.xlu0 %278
        %282 = vset.pattern.permute.xlu0 0
        %283 = vperm.xlu0 %282, %v265
        %v284 = vpop.permute.xlu0 %283
        %287 = vset.pattern.permute.xlu0 0
        %288 = vperm.xlu0 %287, %v266
        %v289 = vpop.permute.xlu0 %288
        %292 = vset.pattern.permute.xlu0 0
        %293 = vperm.xlu0 %292, %v267
        %v294 = vpop.permute.xlu0 %293
        %297 = vset.pattern.permute.xlu0 0
        %298 = vperm.xlu0 %297, %v268
        %v299 = vpop.permute.xlu0 %298
        %302 = vset.pattern.permute.xlu0 0
        %303 = vperm.xlu0 %302, %v269
        %v304 = vpop.permute.xlu0 %303
        %307 = vset.pattern.permute.xlu0 0
        %308 = vperm.xlu0 %307, %v270
        %v309 = vpop.permute.xlu0 %308
        %v312 = vcombine.high %v254, %v254
        %vm313 = vcmask 31744
        %v315 = vsel %vm313, %v255, 0
        %v318 = vsel %vm313, %v256, 0
        %v321 = vsel %vm313, %v257, 0
        %v324 = vsel %vm313, %v258, 0
        %v327 = vsel %vm313, %v259, 0
        %v330 = vsel %vm313, %v260, 0
        %v333 = vsel %vm313, %v261, 0
        %v336 = vsel %vm313, %v262, 0
        %vm338 = vcmask 1043456
        %v339 = vsel %vm338, %v254, 0
        %v341 = vsel %vm338, %v312, 0
        %343 = vmatprep.subr.mxu0 0.0
        %344 = vmatpush1.msra.mxu0 0.0
        %345 = vmatprep.subr.mxu0 0.0
        %346 = vmatpush1.msra.mxu0 0.0
        %347 = vmatprep.subr.mxu0 0.0
        %348 = vmatpush1.msra.mxu0 0.0
        %349 = vmatprep.subr.mxu0 0.0
        %350 = vmatpush1.msra.mxu0 0.0
        %351 = vmatprep.subr.mxu0 0.0
        %352 = vmatpush1.msra.mxu0 0.0
        %353 = vmatprep.subr.mxu0 0.0
        %354 = vmatpush1.msra.mxu0 0.0
        %355 = vmatprep.subr.mxu0 0.0
        %356 = vmatpush1.msra.mxu0 0.0
        %357 = vmatprep.subr.mxu0 0.0
        %358 = vmatpush1.msra.mxu0 0.0
        %359 = vmatprep.subr.mxu0 0.0
        %360 = vmatpush1.msra.mxu0 0.0
        %361 = vmatprep.subr.mxu0 0.0
        %362 = vmatpush1.msra.mxu0 0.0
        %363 = vmatprep.subr.mxu0 0.0
        %364 = vmatpush1.msra.mxu0 0.0
        %365 = vmatprep.subr.mxu0 0.0
        %366 = vmatpush1.msra.mxu0 0.0
        %367 = vmatprep.subr.mxu0 0.0
        %368 = vmatpush1.msra.mxu0 0.0
        %369 = vmatprep.subr.mxu0 0.0
        %370 = vmatpush1.msra.mxu0 0.0
        %371 = vmatprep.subr.mxu0 0.0
        %372 = vmatpush1.msra.mxu0 0.0
        %373 = vmatprep.subr.mxu0 %v341
        %374 = vmatpush1.msra.mxu0 %v339
        %375 = vmatprep.subr.mxu0 0.0
        %376 = vmatpush2.msra.mxu0 0.0
        %377 = vmatprep.subr.mxu0 0.0
        %378 = vmatpush2.msra.mxu0 0.0
        %379 = vmatprep.subr.mxu0 0.0
        %380 = vmatpush2.msra.mxu0 0.0
        %381 = vmatprep.subr.mxu0 0.0
        %382 = vmatpush2.msra.mxu0 0.0
        %383 = vmatprep.subr.mxu0 0.0
        %384 = vmatpush2.msra.mxu0 0.0
        %385 = vmatprep.subr.mxu0 0.0
        %386 = vmatpush2.msra.mxu0 0.0
        %387 = vmatprep.subr.mxu0 0.0
        %388 = vmatpush2.msra.mxu0 0.0
        %389 = vmatprep.subr.mxu0 0.0
        %390 = vmatpush2.msra.mxu0 0.0
        %391 = vmatprep.subr.mxu0 0.0
        %392 = vmatpush2.msra.mxu0 0.0
        %393 = vmatprep.subr.mxu0 0.0
        %394 = vmatpush2.msra.mxu0 0.0
        %395 = vmatprep.subr.mxu0 0.0
        %396 = vmatpush2.msra.mxu0 0.0
        %397 = vmatprep.subr.mxu0 0.0
        %398 = vmatpush2.msra.mxu0 0.0
        %399 = vmatprep.subr.mxu0 0.0
        %400 = vmatpush2.msra.mxu0 0.0
        %401 = vmatprep.subr.mxu0 0.0
        %402 = vmatpush2.msra.mxu0 0.0
        %403 = vmatprep.subr.mxu0 0.0
        %404 = vmatpush2.msra.mxu0 0.0
        %405 = vmatprep.subr.mxu0 0.0
        %406 = vmatpush2.msra.mxu0 0.0
        %407 = vmatprep.mubr.f32.mxu0 0.0
        %408 = vmatmul.mubr.f32.gmra.mxu0 %v315
        %v409 = vpop.f32.mrf.mxu0
        %v410 = vadd.f32 %v274, %v409
        %v411 = vpop.f32.mrf.mxu0
        %v412 = vadd.f32 %v274, %v411
        %413 = vmatprep.mubr.f32.mxu0 0.0
        %414 = vmatmul.mubr.f32.gmra.mxu0 %v318
        %v415 = vpop.f32.mrf.mxu0
        %v416 = vadd.f32 %v279, %v415
        %v417 = vpop.f32.mrf.mxu0
        %v418 = vadd.f32 %v279, %v417
        %419 = vmatprep.mubr.f32.mxu0 0.0
        %420 = vmatmul.mubr.f32.gmra.mxu0 %v321
        %v421 = vpop.f32.mrf.mxu0
        %v422 = vadd.f32 %v284, %v421
        %v423 = vpop.f32.mrf.mxu0
        %v424 = vadd.f32 %v284, %v423
        %425 = vmatprep.mubr.f32.mxu0 0.0
        %426 = vmatmul.mubr.f32.gmra.mxu0 %v324
        %v427 = vpop.f32.mrf.mxu0
        %v428 = vadd.f32 %v289, %v427
        %v429 = vpop.f32.mrf.mxu0
        %v430 = vadd.f32 %v289, %v429
        %431 = vmatprep.mubr.f32.mxu0 0.0
        %432 = vmatmul.mubr.f32.gmra.mxu0 %v327
        %v433 = vpop.f32.mrf.mxu0
        %v434 = vadd.f32 %v294, %v433
        %v435 = vpop.f32.mrf.mxu0
        %v436 = vadd.f32 %v294, %v435
        %437 = vmatprep.mubr.f32.mxu0 0.0
        %438 = vmatmul.mubr.f32.gmra.mxu0 %v330
        %v439 = vpop.f32.mrf.mxu0
        %v440 = vadd.f32 %v299, %v439
        %v441 = vpop.f32.mrf.mxu0
        %v442 = vadd.f32 %v299, %v441
        %443 = vmatprep.mubr.f32.mxu0 0.0
        %444 = vmatmul.mubr.f32.gmra.mxu0 %v333
        %v445 = vpop.f32.mrf.mxu0
        %v446 = vadd.f32 %v304, %v445
        %v447 = vpop.f32.mrf.mxu0
        %v448 = vadd.f32 %v304, %v447
        %449 = vmatprep.mubr.f32.mxu0 0.0
        %450 = vmatmul.mubr.f32.gmra.mxu0 %v336
        %v451 = vpop.f32.mrf.mxu0
        %v452 = vadd.f32 %v309, %v451
        %v453 = vpop.f32.mrf.mxu0
        %v454 = vadd.f32 %v309, %v453
        %455 = vdwg.mxu0
        %v456 = vmul.f32 %v434, 0.5
        %v457 = vmul.f32 %v436, 0.5
        %v458 = vmul.f32 %v440, 0.5
        %v459 = vmul.f32 %v442, 0.5
        %v460 = vmul.f32 %v446, 0.5
        %v461 = vmul.f32 %v448, 0.5
        %v462 = vmul.f32 %v452, 0.5
        %v463 = vmul.f32 %v454, 0.5
        %v464 = vrcp.pop 1.4142135
        %v465 = vmul.f32 %v434, %v464
        %v466 = vmul.f32 %v436, %v464
        %v467 = vmul.f32 %v440, %v464
        %v468 = vmul.f32 %v442, %v464
        %v469 = vmul.f32 %v446, %v464
        %v470 = vmul.f32 %v448, %v464
        %v471 = vmul.f32 %v452, %v464
        %v472 = vmul.f32 %v454, %v464
        %v473 = verf.f32.pop %v465
        %v474 = verf.f32.pop %v466
        %v475 = verf.f32.pop %v467
        %v476 = verf.f32.pop %v468
        %v477 = verf.f32.pop %v469
        %v478 = verf.f32.pop %v470
        %v479 = verf.f32.pop %v471
        %v480 = verf.f32.pop %v472
        %v481 = vadd.f32 %v473, 1.0
        %v482 = vadd.f32 %v474, 1.0
        %v483 = vadd.f32 %v475, 1.0
        %v484 = vadd.f32 %v476, 1.0
        %v485 = vadd.f32 %v477, 1.0
        %v486 = vadd.f32 %v478, 1.0
        %v487 = vadd.f32 %v479, 1.0
        %v488 = vadd.f32 %v480, 1.0
        %v489 = vmul.f32 %v456, %v481
        %v490 = vmul.f32 %v457, %v482
        %v491 = vmul.f32 %v458, %v483
        %v492 = vmul.f32 %v459, %v484
        %v493 = vmul.f32 %v460, %v485
        %v494 = vmul.f32 %v461, %v486
        %v495 = vmul.f32 %v462, %v487
        %v496 = vmul.f32 %v463, %v488
        %v497 = vmul.f32 %v410, %v489
        %v498 = vmul.f32 %v412, %v490
        %v499 = vmul.f32 %v416, %v491
        %v500 = vmul.f32 %v418, %v492
        %v501 = vmul.f32 %v422, %v493
        %v502 = vmul.f32 %v424, %v494
        %v503 = vmul.f32 %v428, %v495
        %v504 = vmul.f32 %v430, %v496
        %v505 = vld [vmem:[%s3] sm:$0xf]
        %v506 = vld [vmem:[%s4] sm:$0xf]
        %508 = vset.pattern.permute.xlu0 0
        %509 = vperm.xlu0 %508, %v506
        %v510 = vpop.permute.xlu0 %509
        %vm512 = vcmask 261120
        %v514 = vsel %vm512, %v505, 0
        %516 = vmatprep.subr.mxu0 0.0
        %517 = vmatpush1.msra.mxu0 0.0
        %518 = vmatprep.subr.mxu0 0.0
        %519 = vmatpush1.msra.mxu0 0.0
        %520 = vmatprep.subr.mxu0 0.0
        %521 = vmatpush1.msra.mxu0 0.0
        %522 = vmatprep.subr.mxu0 0.0
        %523 = vmatpush1.msra.mxu0 0.0
        %524 = vmatprep.subr.mxu0 0.0
        %525 = vmatpush1.msra.mxu0 0.0
        %526 = vmatprep.subr.mxu0 0.0
        %527 = vmatpush1.msra.mxu0 0.0
        %528 = vmatprep.subr.mxu0 0.0
        %529 = vmatpush1.msra.mxu0 0.0
        %530 = vmatprep.subr.mxu0 0.0
        %531 = vmatpush1.msra.mxu0 0.0
        %532 = vmatprep.subr.mxu0 0.0
        %533 = vmatpush1.msra.mxu0 0.0
        %534 = vmatprep.subr.mxu0 0.0
        %535 = vmatpush1.msra.mxu0 0.0
        %536 = vmatprep.subr.mxu0 0.0
        %537 = vmatpush1.msra.mxu0 0.0
        %538 = vmatprep.subr.mxu0 0.0
        %539 = vmatpush1.msra.mxu0 0.0
        %540 = vmatprep.subr.mxu0 %v504
        %541 = vmatpush1.msra.mxu0 %v503
        %542 = vmatprep.subr.mxu0 %v502
        %543 = vmatpush1.msra.mxu0 %v501
        %544 = vmatprep.subr.mxu0 %v500
        %545 = vmatpush1.msra.mxu0 %v499
        %546 = vmatprep.subr.mxu0 %v498
        %547 = vmatpush1.msra.mxu0 %v497
        %548 = vmatprep.subr.mxu0 0.0
        %549 = vmatpush2.msra.mxu0 0.0
        %550 = vmatprep.subr.mxu0 0.0
        %551 = vmatpush2.msra.mxu0 0.0
        %552 = vmatprep.subr.mxu0 0.0
        %553 = vmatpush2.msra.mxu0 0.0
        %554 = vmatprep.subr.mxu0 0.0
        %555 = vmatpush2.msra.mxu0 0.0
        %556 = vmatprep.subr.mxu0 0.0
        %557 = vmatpush2.msra.mxu0 0.0
        %558 = vmatprep.subr.mxu0 0.0
        %559 = vmatpush2.msra.mxu0 0.0
        %560 = vmatprep.subr.mxu0 0.0
        %561 = vmatpush2.msra.mxu0 0.0
        %562 = vmatprep.subr.mxu0 0.0
        %563 = vmatpush2.msra.mxu0 0.0
        %564 = vmatprep.subr.mxu0 0.0
        %565 = vmatpush2.msra.mxu0 0.0
        %566 = vmatprep.subr.mxu0 0.0
        %567 = vmatpush2.msra.mxu0 0.0
        %568 = vmatprep.subr.mxu0 0.0
        %569 = vmatpush2.msra.mxu0 0.0
        %570 = vmatprep.subr.mxu0 0.0
        %571 = vmatpush2.msra.mxu0 0.0
        %572 = vmatprep.subr.mxu0 0.0
        %573 = vmatpush2.msra.mxu0 0.0
        %574 = vmatprep.subr.mxu0 0.0
        %575 = vmatpush2.msra.mxu0 0.0
        %576 = vmatprep.subr.mxu0 0.0
        %577 = vmatpush2.msra.mxu0 0.0
        %578 = vmatprep.subr.mxu0 0.0
        %579 = vmatpush2.msra.mxu0 0.0
        %580 = vmatprep.mubr.f32.mxu0 0.0
        %581 = vmatmul.mubr.f32.gmra.mxu0 %v514
        %v582 = vpop.f32.mrf.mxu0
        %v583 = vadd.f32 %v510, %v582
        %v584 = vpop.f32.mrf.mxu0
        %v585 = vadd.f32 %v510, %v584
        %586 = vdwg.mxu0
        %v589 = vcombine.low %v583, %v585
        %591 = vst [vmem:[%s242] sm:$0xff] %v589
        %s592 = sand.u32 %s153, 1
        %s593 = scalar_lea.sflag [#allocation3], %s592
        %s594 = sand.u32 %s153, 1
        %s595 = smul.addr %s594, 8
        %s596 = scalar_lea.vmem [#allocation2], %s595
        // Predicated region
        $region41: #{tpu_custom_call.1} parent=39 // pred_check
          %p597 = pneg %p163
        $region42: #{tpu_custom_call.1} parent=39 // pred_check_branch
          %599 = sbr.rel (%p597) target = $region44
        $region43: #{tpu_custom_call.1} parent=39 // pred_region
          %s600 = smul.u32 2, %s24
          %s602 = ssub.s32 128, 128
          %603 = vsyncadd %s593, %s602
          %s604 = smul.addr %s23, 2
          %s605 = sadd.s32 %s600, %s604
          %s606 = smul.addr %s605, 64
          %s607 = scalar_lea.hbm %s5, %s606
          %s609 = sshll.u32 %s596, 4
          %s610 = int_to_ptr.vmem [resolvable:$true] %s609
          %612 = dma.vmem_to_hbm [thread:$0]  %s610, 128, %s607, %s593
        $region44: #{tpu_custom_call.1} parent=39 // pred_fallthru
          _
      $region40: #{tpu_custom_call.1} parent=5 // pred_fallthru
        _
      %p613 = scmp.le.s32.totalorder 2, %s14
      // Predicated region
      $region45: #{tpu_custom_call.1} parent=5 // pred_check
        %p614 = pneg %p613
      $region46: #{tpu_custom_call.1} parent=5 // pred_check_branch
        %616 = sbr.rel (%p614) target = $region48
      $region47: #{tpu_custom_call.1} parent=5 // pred_region
        %s617 = ssub.s32 %s14, 2
        // Predicated region
        $region49: #{tpu_custom_call.1} parent=47 // pred_check
          %p618 = pneg %p169
        $region50: #{tpu_custom_call.1} parent=47 // pred_check_branch
          %620 = sbr.rel (%p618) target = $region52
        $region51: #{tpu_custom_call.1} parent=47 // pred_region
          %s621 = sand.u32 %s154, 1
          %s622 = scalar_lea.sflag [#allocation3], %s621
          %s623 = sand.u32 %s154, 1
          %s624 = smul.addr %s623, 8
          %s625 = scalar_lea.vmem [#allocation2], %s624
          %626 = dma.done %s622, 128
        $region52: #{tpu_custom_call.1} parent=47 // pred_fallthru
          _
      $region48: #{tpu_custom_call.1} parent=5 // pred_fallthru
        _
    $region6: #{tpu_custom_call.1} parent=1 // loop_footer
      %s18 = sadd.s32 1, %s14
    $region7: #{tpu_custom_call.1} parent=1 // loop_footer_branch
      %13 = sbr.rel target = $region3
    $region8: #{tpu_custom_call.1} parent=1 // loop_exit
      _
    %627 = vsyncpa [#allocation3], 1
    %s628 = scalar_lea.sflag [#allocation3], 1
    %629 = vsyncpa %s628, 1

</llo_original>
